<compile_context>
chip_gen: v7x
topology: tpu7x:2x2x1
jax: 0.10.0
libtpu: 0.0.40
codegen_flags: <defaults>
</compile_context>

<pallas_src>
import jax
import jax.numpy as jnp
from jax.experimental import pallas as pl
from jax.experimental.pallas import tpu as pltpu

# Widest lane-dense slab widths to try (all multiples of 128).
_LANE_WIDTHS = (1024, 512, 256, 128)
# (1024, 1024) f32 tile = 4 MiB per VMEM buffer -> 16 MiB total with 2-deep
# buffering on both in and out specs; fits all of v5e/v6e/v7x with headroom.
_MAX_TILE_ROWS = 1024


def _identity_copy_kernel(x_ref, o_ref):
    # The abstract forward has no compute; the data path is a pure pass-through.
    o_ref[...] = x_ref[...]


@jax.jit
def neuralnet_forward(x: jax.Array) -> jax.Array:
    """Forward pass of the abstract NeuralNet base class (identity data path)."""
    orig_shape = x.shape
    n_elems = x.size

    # Pick the widest lane-dense width that divides the element count exactly,
    # so the flatten/reshape is metadata-only (no pad / slice HBM passes).
    width = next((w for w in _LANE_WIDTHS if n_elems and n_elems % w == 0), None)
    if width is None:
        # Abstract forward is a no-op; a non-128-divisible size would need a
        # pad + slice round trip (two extra full HBM passes) just to copy.
        return x

    rows = n_elems // width
    slab = x.reshape(rows, width)  # row-major reshape: metadata only

    # Tile the row axis; block_shape rows are either the full extent or a
    # multiple of 8, keeping the (8, 128) layout constraint satisfied.
    tile_rows = rows if rows <= _MAX_TILE_ROWS else _MAX_TILE_ROWS
    num_tiles = pl.cdiv(rows, tile_rows)

    out = pl.pallas_call(
        _identity_copy_kernel,
        out_shape=jax.ShapeDtypeStruct((rows, width), x.dtype),
        grid_spec=pltpu.PrefetchScalarGridSpec(
            num_scalar_prefetch=0,
            grid=(num_tiles,),
            in_specs=[pl.BlockSpec((tile_rows, width), lambda i: (i, 0))],
            out_specs=pl.BlockSpec((tile_rows, width), lambda i: (i, 0)),
        ),
        input_output_aliases={0: 0},  # identity: let XLA reuse the input buffer
        compiler_params=pltpu.CompilerParams(
            dimension_semantics=("parallel",),   # shard tiles across TCs (v7x)
            vmem_limit_bytes=32 * 1024 * 1024,   # explicit: v5e default is 16 MiB
        ),
    )(slab)

    return out.reshape(orig_shape)


if __name__ == "__main__":
    key = jax.random.PRNGKey(0)
    # Small NCHW input consistent with what a NeuralNet subclass would consume.
    x = jax.random.normal(key, (2, 4, 16, 16), dtype=jnp.float32)

    y = neuralnet_forward(x)
    y = jax.block_until_ready(y)

    # Sanity check: abstract forward's data path is a bit-exact identity.
    assert y.shape == x.shape and y.dtype == x.dtype
    assert bool(jnp.array_equal(y, x))

    print("KERNEL_OK")
</pallas_src>

<mosaic_0001>
module attributes {stable_mosaic.version = 11 : i64} {
  func.func @_identity_copy_kernel(%arg0: i32, %arg1: memref<2x1024xf32, #tpu.memory_space<vmem>>, %arg2: memref<2x1024xf32, #tpu.memory_space<vmem>>) attributes {dimension_semantics = [#tpu.dimension_semantics<parallel>], iteration_bounds = array<i64: 1>, scalar_prefetch = 0 : i64, scratch_operands = 0 : i64, tpu.core_type = #tpu.core_type<tc>, window_params = [{transform_indices = @transform_0, window_bounds = array<i64: 2, 1024>}, {transform_indices = @transform_1, window_bounds = array<i64: 2, 1024>}]} {
    %c0 = arith.constant 0 : index
    %c0_0 = arith.constant 0 : index
    %0 = vector.load %arg1[%c0, %c0_0] : memref<2x1024xf32, #tpu.memory_space<vmem>>, vector<2x1024xf32>
    %c0_1 = arith.constant 0 : index
    %c0_2 = arith.constant 0 : index
    %1 = vector.load %arg2[%c0_1, %c0_2] : memref<2x1024xf32, #tpu.memory_space<vmem>>, vector<2x1024xf32>
    tpu.vector_store %arg2[%c0_1, %c0_2], %0 {strides = array<i32>} : memref<2x1024xf32, #tpu.memory_space<vmem>>, vector<2x1024xf32>,
    return
  }
  func.func @transform_0(%arg0: i32) -> (i32, i32) {
    %c0_i32 = arith.constant 0 : i32
    %c0_i32_0 = arith.constant 0 : i32
    return %arg0, %c0_i32 : i32, i32
  }
  func.func @transform_1(%arg0: i32) -> (i32, i32) {
    %c0_i32 = arith.constant 0 : i32
    %c0_i32_0 = arith.constant 0 : i32
    return %arg0, %c0_i32 : i32, i32
  }
}

</mosaic_0001>

<llo_original>
// kernel: neuralnet_forward.1
$region0: #{neuralnet_forward.1}
  #allocation0 [shape = 'u32[]', space=smem, size = 0x4, offset = 0x4, fixed_abs, tag = 'smem constant byte address 0x4 - core index']
  #allocation1 [shape = 'u32[144,128]{1,0:T(1,128)}', space=vmem, size = 0x12000, scoped, tag = 'internal scratch']
  %s0 = inlined_call_operand.vmem [shape: f32[2,1024], index: 0, kind: input, shape index: {}, may-alias: {0,1}]
  %s1 = inlined_call_operand.vmem [shape: f32[2,1024], index: 1, kind: output, shape index: {}, may-alias: {0,1}]
  %s2 = sld [smem:[#allocation0]]
  $region14: #{neuralnet_forward.1} parent=0
    _
  %s4 = ssub.s32 1, %s2
  %s5 = scalar_select 0, %s4, %s2
  // Predicated region
  $region2: #{neuralnet_forward.1} parent=0 // pred_check
    _
  $region3: #{neuralnet_forward.1} parent=0 // pred_check_branch
    %7 = sbr.rel (0) target = $region5
  $region4: #{neuralnet_forward.1} parent=0 // pred_region
    _
  $region5: #{neuralnet_forward.1} parent=0 // pred_fallthru
    _
  %v8 = vld [vmem:[%s0] sm:$0xff]
  %v9 = vld [vmem:[%s0 + $0x8] sm:$0xff]
  %10 = vst [vmem:[%s1] sm:$0xff] %v8
  %11 = vst [vmem:[%s1 + $0x8] sm:$0xff] %v9
  // Predicated region
  $region6: #{neuralnet_forward.1} parent=0 // pred_check
    _
  $region7: #{neuralnet_forward.1} parent=0 // pred_check_branch
    %13 = sbr.rel (0) target = $region9
  $region8: #{neuralnet_forward.1} parent=0 // pred_region
    _
  $region9: #{neuralnet_forward.1} parent=0 // pred_fallthru
    _
  // Predicated region
  $region10: #{neuralnet_forward.1} parent=0 // pred_check
    _
  $region11: #{neuralnet_forward.1} parent=0 // pred_check_branch
    %15 = sbr.rel (0) target = $region13
  $region12: #{neuralnet_forward.1} parent=0 // pred_region
    _
  $region13: #{neuralnet_forward.1} parent=0 // pred_fallthru
    _

</llo_original>
